<compile_context>
chip_gen: v7x
topology: tpu7x:2x2x1
jax: 0.10.0
libtpu: 0.0.40
codegen_flags: <defaults>
</compile_context>

<pallas_src>
import functools

import jax
import jax.numpy as jnp
from jax.experimental import pallas as pl
from jax.experimental.pallas import tpu as pltpu

LANE = 128   # f32 lane width
SUBLANE = 8  # f32 sublane width


def _round_up(n, m):
    return ((n + m - 1) // m) * m


def _pad2d(a, rows, cols):
    return jnp.pad(a, ((0, rows - a.shape[0]), (0, cols - a.shape[1])))


def _cond_embedding_kernel(x_ref, w0_ref, w1_ref, w2_ref, b_ref, o_ref,
                           *, Cp, Dp, compute_dtype):
    """One batch tile: three (matmul + bias + SiLU) layers, fully in VMEM."""

    def silu(h):
        # sigmoid(h) = 1 / (1 + exp(-h)); exp and reciprocal both land on the
        # EUP slot, keeping the 4 VALU slots free for the muls/adds.
        return h * pl.reciprocal(1.0 + jnp.exp(-h), approx=True)

    # Fused bias row: [b0 | b1 | b2], each slot already lane-padded.
    b0 = b_ref[0:1, 0:Cp]
    b1 = b_ref[0:1, Cp:Cp + Dp]
    b2 = b_ref[0:1, Cp + Dp:Cp + 2 * Dp]

    # Layer 0: (TB, Kp) @ (Kp, Cp)
    h = jnp.dot(x_ref[...].astype(compute_dtype), w0_ref[...],
                preferred_element_type=jnp.float32)
    h = silu(h + b0)

    # Layer 1: (TB, Cp) @ (Cp, Dp)
    h = jnp.dot(h.astype(compute_dtype), w1_ref[...],
                preferred_element_type=jnp.float32)
    h = silu(h + b1)

    # Layer 2: (TB, Dp) @ (Dp, Dp)
    h = jnp.dot(h.astype(compute_dtype), w2_ref[...],
                preferred_element_type=jnp.float32)
    h = silu(h + b2)

    o_ref[...] = h.astype(o_ref.dtype)


def condition_embedding(x, params, *, block_b=256, weight_dtype=jnp.bfloat16):
    """x: (B, embedding_length) f32. Returns (B, time_embed_dim) f32.

    params are PyTorch-style f32 Linears already transposed to (in, out);
    padding to lane multiples, bf16 weight cast and bias fusion happen here.
    """
    w0, b0, w1, b1, w2, b2 = params
    B, K = x.shape
    C = w0.shape[1]          # model_channels
    D = w2.shape[1]          # time_embed_dim

    Kp = _round_up(K, LANE)
    Cp = _round_up(C, LANE)
    Dp = _round_up(D, LANE)

    # Batch tile: multiple of the f32 sublane, capped at block_b (256 default).
    TB = min(_round_up(B, SUBLANE), _round_up(block_b, SUBLANE))
    Bp = _round_up(B, TB)

    xp = _pad2d(x, Bp, Kp).astype(jnp.float32)
    w0p = _pad2d(w0, Kp, Cp).astype(weight_dtype)
    w1p = _pad2d(w1, Cp, Dp).astype(weight_dtype)
    w2p = _pad2d(w2, Dp, Dp).astype(weight_dtype)
    # Single fused bias row (f32), kept lane-aligned per slot.
    bias = jnp.concatenate([
        jnp.pad(b0, (0, Cp - C)),
        jnp.pad(b1, (0, Dp - D)),
        jnp.pad(b2, (0, Dp - D)),
    ]).reshape(1, Cp + 2 * Dp).astype(jnp.float32)

    kernel = functools.partial(_cond_embedding_kernel,
                               Cp=Cp, Dp=Dp, compute_dtype=weight_dtype)

    out = pl.pallas_call(
        kernel,
        out_shape=jax.ShapeDtypeStruct((Bp, Dp), jnp.float32),
        grid=(Bp // TB,),
        in_specs=[
            pl.BlockSpec((TB, Kp), lambda i: (i, 0)),          # x: batch-tiled
            pl.BlockSpec((Kp, Cp), lambda i: (0, 0)),          # w0: resident
            pl.BlockSpec((Cp, Dp), lambda i: (0, 0)),          # w1: resident
            pl.BlockSpec((Dp, Dp), lambda i: (0, 0)),          # w2: resident
            pl.BlockSpec((1, Cp + 2 * Dp), lambda i: (0, 0)),  # fused biases
        ],
        out_specs=pl.BlockSpec((TB, Dp), lambda i: (i, 0)),
        compiler_params=pltpu.CompilerParams(
            dimension_semantics=("parallel",)),                # v7x: 2 TCs
    )(xp, w0p, w1p, w2p, bias)

    return out[:B, :D]


def init_params(key, model_channels, time_embed_dim, embedding_length):
    """Deterministic init matching nn.Linear; weights stored as (in, out) f32."""
    ks = jax.random.split(key, 6)

    def linear(kw, kb, fan_in, fan_out):
        bound = 1.0 / jnp.sqrt(fan_in)
        w = jax.random.uniform(kw, (fan_in, fan_out), jnp.float32, -bound, bound)
        b = jax.random.uniform(kb, (fan_out,), jnp.float32, -bound, bound)
        return w, b

    w0, b0 = linear(ks[0], ks[1], embedding_length, model_channels)
    w1, b1 = linear(ks[2], ks[3], model_channels, time_embed_dim)
    w2, b2 = linear(ks[4], ks[5], time_embed_dim, time_embed_dim)
    return (w0, b0, w1, b1, w2, b2)


def reference(x, params, weight_dtype=jnp.bfloat16):
    """Pure-JAX reference mirroring the kernel's bf16 MXU inputs (f32 accum)."""
    w0, b0, w1, b1, w2, b2 = params

    def q(a):  # same quantization the kernel applies to MXU inputs
        return a.astype(weight_dtype).astype(jnp.float32)

    h = jax.nn.silu(q(x) @ q(w0) + b0)
    h = jax.nn.silu(q(h) @ q(w1) + b1)
    h = jax.nn.silu(q(h) @ q(w2) + b2)
    return h


if __name__ == "__main__":
    model_channels = 32
    time_embed_dim = 64
    embedding_length = 40
    B = 2

    key = jax.random.PRNGKey(0)
    k_x, k_p = jax.random.split(key)
    x = jax.random.normal(k_x, (B, embedding_length), jnp.float32)
    params = init_params(k_p, model_channels, time_embed_dim, embedding_length)

    out = jax.block_until_ready(condition_embedding(x, params))
    ref = reference(x, params)

    assert out.shape == (B, time_embed_dim)
    # Tolerance covers the approximate EUP reciprocal and MXU accumulation
    # order; bf16 quantization is mirrored in the reference.
    assert jnp.allclose(out, ref, atol=5e-3, rtol=5e-3), "mismatch vs reference"

    print("KERNEL_OK")
</pallas_src>

<mosaic_0001>
module attributes {stable_mosaic.version = 11 : i64} {
  func.func @_cond_embedding_kernel(%arg0: i32, %arg1: memref<8x128xf32, #tpu.memory_space<vmem>>, %arg2: memref<128x128xbf16, #tpu.memory_space<vmem>>, %arg3: memref<128x128xbf16, #tpu.memory_space<vmem>>, %arg4: memref<128x128xbf16, #tpu.memory_space<vmem>>, %arg5: memref<1x384xf32, #tpu.memory_space<vmem>>, %arg6: memref<8x128xf32, #tpu.memory_space<vmem>>) attributes {dimension_semantics = [#tpu.dimension_semantics<parallel>], iteration_bounds = array<i64: 1>, scalar_prefetch = 0 : i64, scratch_operands = 0 : i64, tpu.core_type = #tpu.core_type<tc>, window_params = [{transform_indices = @transform_0, window_bounds = array<i64: 8, 128>}, {pipeline_mode = #tpu.pipeline_mode<synchronous>, transform_indices = @transform_1, window_bounds = array<i64: 128, 128>}, {pipeline_mode = #tpu.pipeline_mode<synchronous>, transform_indices = @transform_2, window_bounds = array<i64: 128, 128>}, {pipeline_mode = #tpu.pipeline_mode<synchronous>, transform_indices = @transform_3, window_bounds = array<i64: 128, 128>}, {pipeline_mode = #tpu.pipeline_mode<synchronous>, transform_indices = @transform_4, window_bounds = array<i64: 1, 384>}, {transform_indices = @transform_5, window_bounds = array<i64: 8, 128>}]} {
    %c0 = arith.constant 0 : index
    %c0_0 = arith.constant 0 : index
    %0 = vector.load %arg5[%c0, %c0_0] : memref<1x384xf32, #tpu.memory_space<vmem>>, vector<1x128xf32>
    %c0_1 = arith.constant 0 : index
    %c128 = arith.constant 128 : index
    %1 = vector.load %arg5[%c0_1, %c128] : memref<1x384xf32, #tpu.memory_space<vmem>>, vector<1x128xf32>
    %c0_2 = arith.constant 0 : index
    %c256 = arith.constant 256 : index
    %2 = vector.load %arg5[%c0_2, %c256] : memref<1x384xf32, #tpu.memory_space<vmem>>, vector<1x128xf32>
    %c0_3 = arith.constant 0 : index
    %c0_4 = arith.constant 0 : index
    %3 = vector.load %arg1[%c0_3, %c0_4] : memref<8x128xf32, #tpu.memory_space<vmem>>, vector<8x128xf32>
    %4 = arith.truncf %3 : vector<8x128xf32> to vector<8x128xbf16>
    %c0_5 = arith.constant 0 : index
    %c0_6 = arith.constant 0 : index
    %5 = vector.load %arg2[%c0_5, %c0_6] : memref<128x128xbf16, #tpu.memory_space<vmem>>, vector<128x128xbf16>
    %cst = arith.constant dense<0.000000e+00> : vector<8x128xf32>
    %6 = tpu.matmul %4, %5, %cst {dimension_numbers = #tpu.dot_dimension_numbers<[1], [0], [0], [1], [0, 0, 1, 1], [], []>} : vector<8x128xbf16>, vector<128x128xbf16>, vector<8x128xf32> -> vector<8x128xf32>
    %7 = vector.broadcast %0 : vector<1x128xf32> to vector<8x128xf32>
    %8 = arith.addf %6, %7 : vector<8x128xf32>
    %cst_7 = arith.constant 0.000000e+00 : f32
    %9 = vector.broadcast %cst_7 : f32 to vector<8x128xf32>
    %10 = arith.subf %9, %8 : vector<8x128xf32>
    %11 = math.exp %10 : vector<8x128xf32>
    %cst_8 = arith.constant 1.000000e+00 : f32
    %12 = vector.broadcast %cst_8 : f32 to vector<8x128xf32>
    %13 = arith.addf %12, %11 : vector<8x128xf32>
    %14 = tpu.reciprocal %13 {approx = true} : vector<8x128xf32> -> vector<8x128xf32>
    %15 = arith.mulf %8, %14 : vector<8x128xf32>
    %16 = arith.truncf %15 : vector<8x128xf32> to vector<8x128xbf16>
    %c0_9 = arith.constant 0 : index
    %c0_10 = arith.constant 0 : index
    %17 = vector.load %arg3[%c0_9, %c0_10] : memref<128x128xbf16, #tpu.memory_space<vmem>>, vector<128x128xbf16>
    %cst_11 = arith.constant dense<0.000000e+00> : vector<8x128xf32>
    %18 = tpu.matmul %16, %17, %cst_11 {dimension_numbers = #tpu.dot_dimension_numbers<[1], [0], [0], [1], [0, 0, 1, 1], [], []>} : vector<8x128xbf16>, vector<128x128xbf16>, vector<8x128xf32> -> vector<8x128xf32>
    %19 = vector.broadcast %1 : vector<1x128xf32> to vector<8x128xf32>
    %20 = arith.addf %18, %19 : vector<8x128xf32>
    %cst_12 = arith.constant 0.000000e+00 : f32
    %21 = vector.broadcast %cst_12 : f32 to vector<8x128xf32>
    %22 = arith.subf %21, %20 : vector<8x128xf32>
    %23 = math.exp %22 : vector<8x128xf32>
    %cst_13 = arith.constant 1.000000e+00 : f32
    %24 = vector.broadcast %cst_13 : f32 to vector<8x128xf32>
    %25 = arith.addf %24, %23 : vector<8x128xf32>
    %26 = tpu.reciprocal %25 {approx = true} : vector<8x128xf32> -> vector<8x128xf32>
    %27 = arith.mulf %20, %26 : vector<8x128xf32>
    %28 = arith.truncf %27 : vector<8x128xf32> to vector<8x128xbf16>
    %c0_14 = arith.constant 0 : index
    %c0_15 = arith.constant 0 : index
    %29 = vector.load %arg4[%c0_14, %c0_15] : memref<128x128xbf16, #tpu.memory_space<vmem>>, vector<128x128xbf16>
    %cst_16 = arith.constant dense<0.000000e+00> : vector<8x128xf32>
    %30 = tpu.matmul %28, %29, %cst_16 {dimension_numbers = #tpu.dot_dimension_numbers<[1], [0], [0], [1], [0, 0, 1, 1], [], []>} : vector<8x128xbf16>, vector<128x128xbf16>, vector<8x128xf32> -> vector<8x128xf32>
    %31 = vector.broadcast %2 : vector<1x128xf32> to vector<8x128xf32>
    %32 = arith.addf %30, %31 : vector<8x128xf32>
    %cst_17 = arith.constant 0.000000e+00 : f32
    %33 = vector.broadcast %cst_17 : f32 to vector<8x128xf32>
    %34 = arith.subf %33, %32 : vector<8x128xf32>
    %35 = math.exp %34 : vector<8x128xf32>
    %cst_18 = arith.constant 1.000000e+00 : f32
    %36 = vector.broadcast %cst_18 : f32 to vector<8x128xf32>
    %37 = arith.addf %36, %35 : vector<8x128xf32>
    %38 = tpu.reciprocal %37 {approx = true} : vector<8x128xf32> -> vector<8x128xf32>
    %39 = arith.mulf %32, %38 : vector<8x128xf32>
    %c0_19 = arith.constant 0 : index
    %c0_20 = arith.constant 0 : index
    %40 = vector.load %arg6[%c0_19, %c0_20] : memref<8x128xf32, #tpu.memory_space<vmem>>, vector<8x128xf32>
    tpu.vector_store %arg6[%c0_19, %c0_20], %39 {strides = array<i32>} : memref<8x128xf32, #tpu.memory_space<vmem>>, vector<8x128xf32>,
    return
  }
  func.func @transform_0(%arg0: i32) -> (i32, i32) {
    %c0_i32 = arith.constant 0 : i32
    %c0_i32_0 = arith.constant 0 : i32
    return %arg0, %c0_i32 : i32, i32
  }
  func.func @transform_1(%arg0: i32) -> (i32, i32) {
    %c0_i32 = arith.constant 0 : i32
    %c0_i32_0 = arith.constant 0 : i32
    %c0_i32_1 = arith.constant 0 : i32
    return %c0_i32, %c0_i32_0 : i32, i32
  }
  func.func @transform_2(%arg0: i32) -> (i32, i32) {
    %c0_i32 = arith.constant 0 : i32
    %c0_i32_0 = arith.constant 0 : i32
    %c0_i32_1 = arith.constant 0 : i32
    return %c0_i32, %c0_i32_0 : i32, i32
  }
  func.func @transform_3(%arg0: i32) -> (i32, i32) {
    %c0_i32 = arith.constant 0 : i32
    %c0_i32_0 = arith.constant 0 : i32
    %c0_i32_1 = arith.constant 0 : i32
    return %c0_i32, %c0_i32_0 : i32, i32
  }
  func.func @transform_4(%arg0: i32) -> (i32, i32) {
    %c0_i32 = arith.constant 0 : i32
    %c0_i32_0 = arith.constant 0 : i32
    %c0_i32_1 = arith.constant 0 : i32
    return %c0_i32, %c0_i32_0 : i32, i32
  }
  func.func @transform_5(%arg0: i32) -> (i32, i32) {
    %c0_i32 = arith.constant 0 : i32
    %c0_i32_0 = arith.constant 0 : i32
    return %arg0, %c0_i32 : i32, i32
  }
}

</mosaic_0001>

<llo_original>
// kernel: tpu_custom_call.1
$region0: #{tpu_custom_call.1}
  #allocation0 [shape = 'u32[]', space=smem, size = 0x4, offset = 0x4, fixed_abs, tag = 'smem constant byte address 0x4 - core index']
  #allocation1 [shape = 'u32[144,128]{1,0:T(1,128)}', space=vmem, size = 0x12000, scoped, tag = 'internal scratch']
  %s0 = inlined_call_operand.hbm [shape: f32[8,128], index: 0, kind: input, shape index: {}]
  %s1 = inlined_call_operand.hbm [shape: bf16[128,128], index: 1, kind: input, shape index: {}]
  %s2 = inlined_call_operand.hbm [shape: bf16[128,128], index: 2, kind: input, shape index: {}]
  %s3 = inlined_call_operand.hbm [shape: bf16[128,128], index: 3, kind: input, shape index: {}]
  %s4 = inlined_call_operand.vmem [shape: f32[1,384], index: 4, kind: input, shape index: {}]
  %s5 = inlined_call_operand.hbm [shape: f32[8,128], index: 5, kind: output, shape index: {}]
  %s6 = sld [smem:[#allocation0]]
  $region46: #{tpu_custom_call.1} parent=0
    _
  %s8 = ssub.s32 1, %s6
  %s9 = scalar_select 0, %s8, %s6
  $region1: #{tpu_custom_call.1} parent=0
    #allocation2 [shape = 'u8[4096]{0}', space=vmem, size = 0x1000, scoped, tag = 'input window, operand 0, single buffered']
    #allocation3 [shape = 's32[1]{0}', space=sflag, size = 0x4, scoped, tag = 'scoped memory for tpu_custom_call.1']
    #allocation4 [shape = 's32[1]{0}', space=sflag, size = 0x4, scoped, tag = 'scoped memory for tpu_custom_call.1']
    #allocation5 [shape = 'u8[32768]{0}', space=vmem, size = 0x8000, scoped, tag = 'input window, operand 1, single buffered']
    #allocation6 [shape = 's32[1]{0}', space=sflag, size = 0x4, scoped, tag = 'scoped memory for tpu_custom_call.1']
    #allocation7 [shape = 'u8[32768]{0}', space=vmem, size = 0x8000, scoped, tag = 'input window, operand 2, single buffered']
    #allocation8 [shape = 'u8[32768]{0}', space=vmem, size = 0x8000, scoped, tag = 'input window, operand 3, single buffered']
    #allocation9 [shape = 's32[1]{0}', space=sflag, size = 0x4, scoped, tag = 'scoped memory for tpu_custom_call.1']
    #allocation10 [shape = 'u8[4096]{0}', space=vmem, size = 0x1000, scoped, tag = 'output window, operand 0, single buffered']
    %10 = vsyncpa [#allocation3], 0
    %11 = vsyncpa [#allocation6], 0
    %12 = vsyncpa [#allocation9], 0
    %13 = vsyncpa [#allocation4], 0
    // Predicated region
    $region2: #{tpu_custom_call.1} parent=1 // pred_check
      _
    $region3: #{tpu_custom_call.1} parent=1 // pred_check_branch
      %15 = sbr.rel (0) target = $region5
    $region4: #{tpu_custom_call.1} parent=1 // pred_region
      %s17 = ssub.s32 128, 128
      %18 = vsyncadd [#allocation3], %s17
      %s20 = sshll.u32 [#allocation2], 4
      %s21 = int_to_ptr.vmem [resolvable:$true] %s20
      %23 = dma.hbm_to_vmem [thread:$0]  %s0, 128, %s21, [#allocation3]
    $region5: #{tpu_custom_call.1} parent=1 // pred_fallthru
      _
    // Predicated region
    $region6: #{tpu_custom_call.1} parent=1 // pred_check
      _
    $region7: #{tpu_custom_call.1} parent=1 // pred_check_branch
      %25 = sbr.rel (0) target = $region9
    $region8: #{tpu_custom_call.1} parent=1 // pred_region
      %s27 = ssub.s32 1024, 1024
      %28 = vsyncadd [#allocation6], %s27
      %s29 = sshll.u32 [#allocation5], 4
      %s30 = int_to_ptr.vmem [resolvable:$true] %s29
      %35 = dma.hbm_to_vmem [thread:$0]  %s1, 1024, %s30, [#allocation6], 64, 64, 4
    $region9: #{tpu_custom_call.1} parent=1 // pred_fallthru
      _
    // Predicated region
    $region10: #{tpu_custom_call.1} parent=1 // pred_check
      _
    $region11: #{tpu_custom_call.1} parent=1 // pred_check_branch
      %37 = sbr.rel (0) target = $region13
    $region12: #{tpu_custom_call.1} parent=1 // pred_region
      %s39 = ssub.s32 1024, 1024
      %40 = vsyncadd [#allocation6], %s39
      %s41 = sshll.u32 [#allocation7], 4
      %s42 = int_to_ptr.vmem [resolvable:$true] %s41
      %47 = dma.hbm_to_vmem [thread:$0]  %s2, 1024, %s42, [#allocation6], 64, 64, 4
    $region13: #{tpu_custom_call.1} parent=1 // pred_fallthru
      _
    // Predicated region
    $region14: #{tpu_custom_call.1} parent=1 // pred_check
      _
    $region15: #{tpu_custom_call.1} parent=1 // pred_check_branch
      %49 = sbr.rel (0) target = $region17
    $region16: #{tpu_custom_call.1} parent=1 // pred_region
      %s51 = ssub.s32 1024, 1024
      %52 = vsyncadd [#allocation9], %s51
      %s53 = sshll.u32 [#allocation8], 4
      %s54 = int_to_ptr.vmem [resolvable:$true] %s53
      %59 = dma.hbm_to_vmem [thread:$0]  %s3, 1024, %s54, [#allocation9], 64, 64, 4
    $region17: #{tpu_custom_call.1} parent=1 // pred_fallthru
      _
    // Predicated region
    $region18: #{tpu_custom_call.1} parent=1 // pred_check
      _
    $region19: #{tpu_custom_call.1} parent=1 // pred_check_branch
      %61 = sbr.rel (0) target = $region21
    $region20: #{tpu_custom_call.1} parent=1 // pred_region
      _
    $region21: #{tpu_custom_call.1} parent=1 // pred_fallthru
      _
    // Predicated region
    $region22: #{tpu_custom_call.1} parent=1 // pred_check
      _
    $region23: #{tpu_custom_call.1} parent=1 // pred_check_branch
      %63 = sbr.rel (0) target = $region25
    $region24: #{tpu_custom_call.1} parent=1 // pred_region
      %64 = dma.done [#allocation3], 128
    $region25: #{tpu_custom_call.1} parent=1 // pred_fallthru
      _
    // Predicated region
    $region26: #{tpu_custom_call.1} parent=1 // pred_check
      _
    $region27: #{tpu_custom_call.1} parent=1 // pred_check_branch
      %66 = sbr.rel (0) target = $region29
    $region28: #{tpu_custom_call.1} parent=1 // pred_region
      %67 = dma.done [#allocation6], 1024
    $region29: #{tpu_custom_call.1} parent=1 // pred_fallthru
      _
    // Predicated region
    $region30: #{tpu_custom_call.1} parent=1 // pred_check
      _
    $region31: #{tpu_custom_call.1} parent=1 // pred_check_branch
      %69 = sbr.rel (0) target = $region33
    $region32: #{tpu_custom_call.1} parent=1 // pred_region
      %70 = dma.done [#allocation6], 1024
    $region33: #{tpu_custom_call.1} parent=1 // pred_fallthru
      _
    // Predicated region
    $region34: #{tpu_custom_call.1} parent=1 // pred_check
      _
    $region35: #{tpu_custom_call.1} parent=1 // pred_check_branch
      %72 = sbr.rel (0) target = $region37
    $region36: #{tpu_custom_call.1} parent=1 // pred_region
      %73 = dma.done [#allocation9], 1024
    $region37: #{tpu_custom_call.1} parent=1 // pred_fallthru
      _
    %v75 = vld [vmem:[%s4] sm:$0x1]
    %v76 = vld [vmem:[%s4 + $0x1] sm:$0x1]
    %v77 = vld [vmem:[%s4 + $0x2] sm:$0x1]
    %v78 = vld [vmem:[#allocation2] sm:$0xff]
    %v79 = vpack.c.bf16 %v78, %v78
    %v80 = vld [vmem:[#allocation5] sm:$0xf]
    %v81 = vld [vmem:[#allocation5 + $0x4] sm:$0xf]
    %v82 = vld [vmem:[#allocation5 + $0x8] sm:$0xf]
    %v83 = vld [vmem:[#allocation5 + $0xc] sm:$0xf]
    %v84 = vld [vmem:[#allocation5 + $0x10] sm:$0xf]
    %v85 = vld [vmem:[#allocation5 + $0x14] sm:$0xf]
    %v86 = vld [vmem:[#allocation5 + $0x18] sm:$0xf]
    %v87 = vld [vmem:[#allocation5 + $0x1c] sm:$0xf]
    %v88 = vld [vmem:[#allocation5 + $0x20] sm:$0xf]
    %v89 = vld [vmem:[#allocation5 + $0x24] sm:$0xf]
    %v90 = vld [vmem:[#allocation5 + $0x28] sm:$0xf]
    %v91 = vld [vmem:[#allocation5 + $0x2c] sm:$0xf]
    %v92 = vld [vmem:[#allocation5 + $0x30] sm:$0xf]
    %v93 = vld [vmem:[#allocation5 + $0x34] sm:$0xf]
    %v94 = vld [vmem:[#allocation5 + $0x38] sm:$0xf]
    %v95 = vld [vmem:[#allocation5 + $0x3c] sm:$0xf]
    %v97 = vlaneseq
    %v98 = vshrl.u32 %v97, 7
    %v99 = vsub.s32 0, %v98
    %v100 = vrot.slane %v75, %v99
    %v118 = vunpack.c.l.b16 %v80
    %v119 = vunpack.c.l.b16 %v81
    %v120 = vunpack.c.l.b16 %v82
    %v121 = vunpack.c.l.b16 %v83
    %v122 = vunpack.c.l.b16 %v84
    %v123 = vunpack.c.l.b16 %v85
    %v124 = vunpack.c.l.b16 %v86
    %v125 = vunpack.c.l.b16 %v87
    %v126 = vunpack.c.l.b16 %v88
    %v127 = vunpack.c.l.b16 %v89
    %v128 = vunpack.c.l.b16 %v90
    %v129 = vunpack.c.l.b16 %v91
    %v130 = vunpack.c.l.b16 %v92
    %v131 = vunpack.c.l.b16 %v93
    %v132 = vunpack.c.l.b16 %v94
    %v133 = vunpack.c.l.b16 %v95
    %v134 = vpack.c.b16 %v119, %v118
    %v135 = vpack.c.b16 %v121, %v120
    %v136 = vpack.c.b16 %v123, %v122
    %v137 = vpack.c.b16 %v125, %v124
    %v138 = vpack.c.b16 %v127, %v126
    %v139 = vpack.c.b16 %v129, %v128
    %v140 = vpack.c.b16 %v131, %v130
    %v141 = vpack.c.b16 %v133, %v132
    %150 = vmatprep.subr.bf16.mxu0 0
    %151 = vmatpush1.bf16.msra.mxu0 %v134
    %152 = vmatprep.subr.bf16.mxu0 0
    %153 = vmatpush1.bf16.msra.mxu0 %v135
    %154 = vmatprep.subr.bf16.mxu0 0
    %155 = vmatpush1.bf16.msra.mxu0 %v136
    %156 = vmatprep.subr.bf16.mxu0 0
    %157 = vmatpush1.bf16.msra.mxu0 %v137
    %158 = vmatprep.subr.bf16.mxu0 0
    %159 = vmatpush1.bf16.msra.mxu0 %v138
    %160 = vmatprep.subr.bf16.mxu0 0
    %161 = vmatpush1.bf16.msra.mxu0 %v139
    %162 = vmatprep.subr.bf16.mxu0 0
    %163 = vmatpush1.bf16.msra.mxu0 %v140
    %164 = vmatprep.subr.bf16.mxu0 0
    %165 = vmatpush1.bf16.msra.mxu0 %v141
    %166 = vmatprep.subr.bf16.mxu0 0
    %167 = vmatpush1.bf16.msra.mxu0 0
    %168 = vmatprep.subr.bf16.mxu0 0
    %169 = vmatpush1.bf16.msra.mxu0 0
    %170 = vmatprep.subr.bf16.mxu0 0
    %171 = vmatpush1.bf16.msra.mxu0 0
    %172 = vmatprep.subr.bf16.mxu0 0
    %173 = vmatpush1.bf16.msra.mxu0 0
    %174 = vmatprep.subr.bf16.mxu0 0
    %175 = vmatpush1.bf16.msra.mxu0 0
    %176 = vmatprep.subr.bf16.mxu0 0
    %177 = vmatpush1.bf16.msra.mxu0 0
    %178 = vmatprep.subr.bf16.mxu0 0
    %179 = vmatpush1.bf16.msra.mxu0 0
    %180 = vmatprep.subr.bf16.mxu0 0
    %181 = vmatpush1.bf16.msra.mxu0 0
    %182 = vmatprep.mubr.bf16.mxu0 0
    %183 = vmatmul.mubr.bf16.gmra.mrb[0].mxu0 %v79
    %v184 = vpop.f32.mrb[0].mxu0
    %v185 = vadd.f32 %v100, %v184
    %v186 = vpop.f32.mrb[0].mxu0
    %v187 = vpop.f32.mrb[0].mxu0
    %v188 = vpop.f32.mrb[0].mxu0
    %189 = vdwg.mxu0
    %v190 = vsub.f32 0.0, %v185
    %v191 = vmul.f32 %v190, 1.442695
    %v192 = vpow.pop %v191
    %v193 = vadd.f32 %v192, 1.0
    %v194 = vrcp.pop %v193
    %v195 = vmul.f32 %v185, %v194
    %v196 = vpack.c.bf16 %v195, %v195
    %v197 = vld [vmem:[#allocation7] sm:$0xf]
    %v198 = vld [vmem:[#allocation7 + $0x4] sm:$0xf]
    %v199 = vld [vmem:[#allocation7 + $0x8] sm:$0xf]
    %v200 = vld [vmem:[#allocation7 + $0xc] sm:$0xf]
    %v201 = vld [vmem:[#allocation7 + $0x10] sm:$0xf]
    %v202 = vld [vmem:[#allocation7 + $0x14] sm:$0xf]
    %v203 = vld [vmem:[#allocation7 + $0x18] sm:$0xf]
    %v204 = vld [vmem:[#allocation7 + $0x1c] sm:$0xf]
    %v205 = vld [vmem:[#allocation7 + $0x20] sm:$0xf]
    %v206 = vld [vmem:[#allocation7 + $0x24] sm:$0xf]
    %v207 = vld [vmem:[#allocation7 + $0x28] sm:$0xf]
    %v208 = vld [vmem:[#allocation7 + $0x2c] sm:$0xf]
    %v209 = vld [vmem:[#allocation7 + $0x30] sm:$0xf]
    %v210 = vld [vmem:[#allocation7 + $0x34] sm:$0xf]
    %v211 = vld [vmem:[#allocation7 + $0x38] sm:$0xf]
    %v212 = vld [vmem:[#allocation7 + $0x3c] sm:$0xf]
    %v214 = vlaneseq
    %v215 = vshrl.u32 %v214, 7
    %v216 = vsub.s32 0, %v215
    %v217 = vrot.slane %v76, %v216
    %v235 = vunpack.c.l.b16 %v197
    %v236 = vunpack.c.l.b16 %v198
    %v237 = vunpack.c.l.b16 %v199
    %v238 = vunpack.c.l.b16 %v200
    %v239 = vunpack.c.l.b16 %v201
    %v240 = vunpack.c.l.b16 %v202
    %v241 = vunpack.c.l.b16 %v203
    %v242 = vunpack.c.l.b16 %v204
    %v243 = vunpack.c.l.b16 %v205
    %v244 = vunpack.c.l.b16 %v206
    %v245 = vunpack.c.l.b16 %v207
    %v246 = vunpack.c.l.b16 %v208
    %v247 = vunpack.c.l.b16 %v209
    %v248 = vunpack.c.l.b16 %v210
    %v249 = vunpack.c.l.b16 %v211
    %v250 = vunpack.c.l.b16 %v212
    %v251 = vpack.c.b16 %v236, %v235
    %v252 = vpack.c.b16 %v238, %v237
    %v253 = vpack.c.b16 %v240, %v239
    %v254 = vpack.c.b16 %v242, %v241
    %v255 = vpack.c.b16 %v244, %v243
    %v256 = vpack.c.b16 %v246, %v245
    %v257 = vpack.c.b16 %v248, %v247
    %v258 = vpack.c.b16 %v250, %v249
    %267 = vmatprep.subr.bf16.mxu0 0
    %268 = vmatpush1.bf16.msra.mxu0 %v251
    %269 = vmatprep.subr.bf16.mxu0 0
    %270 = vmatpush1.bf16.msra.mxu0 %v252
    %271 = vmatprep.subr.bf16.mxu0 0
    %272 = vmatpush1.bf16.msra.mxu0 %v253
    %273 = vmatprep.subr.bf16.mxu0 0
    %274 = vmatpush1.bf16.msra.mxu0 %v254
    %275 = vmatprep.subr.bf16.mxu0 0
    %276 = vmatpush1.bf16.msra.mxu0 %v255
    %277 = vmatprep.subr.bf16.mxu0 0
    %278 = vmatpush1.bf16.msra.mxu0 %v256
    %279 = vmatprep.subr.bf16.mxu0 0
    %280 = vmatpush1.bf16.msra.mxu0 %v257
    %281 = vmatprep.subr.bf16.mxu0 0
    %282 = vmatpush1.bf16.msra.mxu0 %v258
    %283 = vmatprep.subr.bf16.mxu0 0
    %284 = vmatpush1.bf16.msra.mxu0 0
    %285 = vmatprep.subr.bf16.mxu0 0
    %286 = vmatpush1.bf16.msra.mxu0 0
    %287 = vmatprep.subr.bf16.mxu0 0
    %288 = vmatpush1.bf16.msra.mxu0 0
    %289 = vmatprep.subr.bf16.mxu0 0
    %290 = vmatpush1.bf16.msra.mxu0 0
    %291 = vmatprep.subr.bf16.mxu0 0
    %292 = vmatpush1.bf16.msra.mxu0 0
    %293 = vmatprep.subr.bf16.mxu0 0
    %294 = vmatpush1.bf16.msra.mxu0 0
    %295 = vmatprep.subr.bf16.mxu0 0
    %296 = vmatpush1.bf16.msra.mxu0 0
    %297 = vmatprep.subr.bf16.mxu0 0
    %298 = vmatpush1.bf16.msra.mxu0 0
    %299 = vmatprep.mubr.bf16.mxu0 0
    %300 = vmatmul.mubr.bf16.gmra.mrb[0].mxu0 %v196
    %v301 = vpop.f32.mrb[0].mxu0
    %v302 = vadd.f32 %v217, %v301
    %v303 = vpop.f32.mrb[0].mxu0
    %v304 = vpop.f32.mrb[0].mxu0
    %v305 = vpop.f32.mrb[0].mxu0
    %306 = vdwg.mxu0
    %v307 = vsub.f32 0.0, %v302
    %v308 = vmul.f32 %v307, 1.442695
    %v309 = vpow.pop %v308
    %v310 = vadd.f32 %v309, 1.0
    %v311 = vrcp.pop %v310
    %v312 = vmul.f32 %v302, %v311
    %v313 = vpack.c.bf16 %v312, %v312
    %v314 = vld [vmem:[#allocation8] sm:$0xf]
    %v315 = vld [vmem:[#allocation8 + $0x4] sm:$0xf]
    %v316 = vld [vmem:[#allocation8 + $0x8] sm:$0xf]
    %v317 = vld [vmem:[#allocation8 + $0xc] sm:$0xf]
    %v318 = vld [vmem:[#allocation8 + $0x10] sm:$0xf]
    %v319 = vld [vmem:[#allocation8 + $0x14] sm:$0xf]
    %v320 = vld [vmem:[#allocation8 + $0x18] sm:$0xf]
    %v321 = vld [vmem:[#allocation8 + $0x1c] sm:$0xf]
    %v322 = vld [vmem:[#allocation8 + $0x20] sm:$0xf]
    %v323 = vld [vmem:[#allocation8 + $0x24] sm:$0xf]
    %v324 = vld [vmem:[#allocation8 + $0x28] sm:$0xf]
    %v325 = vld [vmem:[#allocation8 + $0x2c] sm:$0xf]
    %v326 = vld [vmem:[#allocation8 + $0x30] sm:$0xf]
    %v327 = vld [vmem:[#allocation8 + $0x34] sm:$0xf]
    %v328 = vld [vmem:[#allocation8 + $0x38] sm:$0xf]
    %v329 = vld [vmem:[#allocation8 + $0x3c] sm:$0xf]
    %v331 = vlaneseq
    %v332 = vshrl.u32 %v331, 7
    %v333 = vsub.s32 0, %v332
    %v334 = vrot.slane %v77, %v333
    %v352 = vunpack.c.l.b16 %v314
    %v353 = vunpack.c.l.b16 %v315
    %v354 = vunpack.c.l.b16 %v316
    %v355 = vunpack.c.l.b16 %v317
    %v356 = vunpack.c.l.b16 %v318
    %v357 = vunpack.c.l.b16 %v319
    %v358 = vunpack.c.l.b16 %v320
    %v359 = vunpack.c.l.b16 %v321
    %v360 = vunpack.c.l.b16 %v322
    %v361 = vunpack.c.l.b16 %v323
    %v362 = vunpack.c.l.b16 %v324
    %v363 = vunpack.c.l.b16 %v325
    %v364 = vunpack.c.l.b16 %v326
    %v365 = vunpack.c.l.b16 %v327
    %v366 = vunpack.c.l.b16 %v328
    %v367 = vunpack.c.l.b16 %v329
    %v368 = vpack.c.b16 %v353, %v352
    %v369 = vpack.c.b16 %v355, %v354
    %v370 = vpack.c.b16 %v357, %v356
    %v371 = vpack.c.b16 %v359, %v358
    %v372 = vpack.c.b16 %v361, %v360
    %v373 = vpack.c.b16 %v363, %v362
    %v374 = vpack.c.b16 %v365, %v364
    %v375 = vpack.c.b16 %v367, %v366
    %384 = vmatprep.subr.bf16.mxu0 0
    %385 = vmatpush1.bf16.msra.mxu0 %v368
    %386 = vmatprep.subr.bf16.mxu0 0
    %387 = vmatpush1.bf16.msra.mxu0 %v369
    %388 = vmatprep.subr.bf16.mxu0 0
    %389 = vmatpush1.bf16.msra.mxu0 %v370
    %390 = vmatprep.subr.bf16.mxu0 0
    %391 = vmatpush1.bf16.msra.mxu0 %v371
    %392 = vmatprep.subr.bf16.mxu0 0
    %393 = vmatpush1.bf16.msra.mxu0 %v372
    %394 = vmatprep.subr.bf16.mxu0 0
    %395 = vmatpush1.bf16.msra.mxu0 %v373
    %396 = vmatprep.subr.bf16.mxu0 0
    %397 = vmatpush1.bf16.msra.mxu0 %v374
    %398 = vmatprep.subr.bf16.mxu0 0
    %399 = vmatpush1.bf16.msra.mxu0 %v375
    %400 = vmatprep.subr.bf16.mxu0 0
    %401 = vmatpush1.bf16.msra.mxu0 0
    %402 = vmatprep.subr.bf16.mxu0 0
    %403 = vmatpush1.bf16.msra.mxu0 0
    %404 = vmatprep.subr.bf16.mxu0 0
    %405 = vmatpush1.bf16.msra.mxu0 0
    %406 = vmatprep.subr.bf16.mxu0 0
    %407 = vmatpush1.bf16.msra.mxu0 0
    %408 = vmatprep.subr.bf16.mxu0 0
    %409 = vmatpush1.bf16.msra.mxu0 0
    %410 = vmatprep.subr.bf16.mxu0 0
    %411 = vmatpush1.bf16.msra.mxu0 0
    %412 = vmatprep.subr.bf16.mxu0 0
    %413 = vmatpush1.bf16.msra.mxu0 0
    %414 = vmatprep.subr.bf16.mxu0 0
    %415 = vmatpush1.bf16.msra.mxu0 0
    %416 = vmatprep.mubr.bf16.mxu0 0
    %417 = vmatmul.mubr.bf16.gmra.mrb[0].mxu0 %v313
    %v418 = vpop.f32.mrb[0].mxu0
    %v419 = vadd.f32 %v334, %v418
    %v420 = vpop.f32.mrb[0].mxu0
    %v421 = vpop.f32.mrb[0].mxu0
    %v422 = vpop.f32.mrb[0].mxu0
    %423 = vdwg.mxu0
    %v424 = vsub.f32 0.0, %v419
    %v425 = vmul.f32 %v424, 1.442695
    %v426 = vpow.pop %v425
    %v427 = vadd.f32 %v426, 1.0
    %v428 = vrcp.pop %v427
    %v429 = vmul.f32 %v419, %v428
    %430 = vst [vmem:[#allocation10] sm:$0xff] %v429
    // Predicated region
    $region38: #{tpu_custom_call.1} parent=1 // pred_check
      _
    $region39: #{tpu_custom_call.1} parent=1 // pred_check_branch
      %432 = sbr.rel (0) target = $region41
    $region40: #{tpu_custom_call.1} parent=1 // pred_region
      %s434 = ssub.s32 128, 128
      %435 = vsyncadd [#allocation4], %s434
      %s437 = sshll.u32 [#allocation10], 4
      %s438 = int_to_ptr.vmem [resolvable:$true] %s437
      %440 = dma.vmem_to_hbm [thread:$0]  %s438, 128, %s5, [#allocation4]
    $region41: #{tpu_custom_call.1} parent=1 // pred_fallthru
      _
    // Predicated region
    $region42: #{tpu_custom_call.1} parent=1 // pred_check
      _
    $region43: #{tpu_custom_call.1} parent=1 // pred_check_branch
      %442 = sbr.rel (0) target = $region45
    $region44: #{tpu_custom_call.1} parent=1 // pred_region
      %443 = dma.done [#allocation4], 128
    $region45: #{tpu_custom_call.1} parent=1 // pred_fallthru
      _
    %444 = vsyncpa [#allocation3], 1
    %445 = vsyncpa [#allocation6], 1
    %446 = vsyncpa [#allocation9], 1
    %447 = vsyncpa [#allocation4], 1

</llo_original>
